<compile_context>
chip_gen: v7x
topology: tpu7x:2x2x1
jax: 0.10.0
libtpu: 0.0.40
codegen_flags: <defaults>
</compile_context>

<pallas_src>
import jax
import jax.numpy as jnp
from jax.experimental import pallas as pl
from jax.experimental.pallas import tpu as pltpu


def conv_relu_kernel(x_ref, w_ref, o_ref, xp_ref):
    # x_ref : (1, H, W*Cin)       bf16  one batch element, (w, ci) in lanes
    # w_ref : (3, W*Cin, W*Cout)  bf16  Toeplitz weights (kw taps + W-pad folded in)
    # o_ref : (1, H, W*Cout)      f32   lane-dense output block
    # xp_ref: (H+2, W*Cin)        bf16  VMEM scratch: H-halo padded input copy
    H = x_ref.shape[1]
    wcin = x_ref.shape[2]
    wcout = o_ref.shape[2]

    # Build the H-halo padded copy in VMEM (W-padding lives in the weights).
    zero_row = jnp.zeros((1, wcin), dtype=xp_ref.dtype)
    xp_ref[0:1, :] = zero_row
    xp_ref[H + 1:H + 2, :] = zero_row
    xp_ref[1:H + 1, :] = x_ref[0]

    # 3 MXU matmuls (one per kh tap): (H, W*Cin) x (W*Cin, W*Cout), f32 accum.
    acc = jnp.zeros((H, wcout), dtype=jnp.float32)
    for kh in range(3):                                   # static -> unrolled
        acc = acc + jnp.dot(xp_ref[kh:kh + H, :], w_ref[kh],
                            preferred_element_type=jnp.float32)

    o_ref[...] = jnp.maximum(acc, 0.0).reshape(1, H, wcout).astype(o_ref.dtype)


def _toeplitz_weights(weight_oihw, W):
    """Fold the kw taps and width zero-padding into (3, W*Cin, W*Cout) bf16."""
    Cout, Cin, _, _ = weight_oihw.shape
    w_hwio = jnp.transpose(weight_oihw, (2, 3, 1, 0))          # (3, 3, Cin, Cout)
    # kw tap connecting input column w_in to output column w_out (pad=1).
    kw = jnp.arange(W)[:, None] - jnp.arange(W)[None, :] + 1   # (W_in, W_out)
    valid = (kw >= 0) & (kw <= 2)
    b = w_hwio[:, jnp.clip(kw, 0, 2), :, :]                    # (3, Win, Wout, Cin, Cout)
    b = jnp.where(valid[None, :, :, None, None], b, 0.0)
    b = jnp.transpose(b, (0, 1, 3, 2, 4))                      # (3, Win, Cin, Wout, Cout)
    return b.reshape(3, W * Cin, W * Cout).astype(jnp.bfloat16)


def conv_relu_pallas(x_nchw, weight_oihw):
    """Forward pass equivalent to nn.Conv2d(k=3, pad=1, bias=False) + ReLU.

    Args:
      x_nchw:      (N, Cin, H, W)   float32
      weight_oihw: (Cout, Cin, 3, 3) float32 (PyTorch layout)
    Returns:
      (N, Cout, H, W) float32
    """
    N, Cin, H, W = x_nchw.shape
    Cout = weight_oihw.shape[0]
    out_dtype = x_nchw.dtype

    # NCHW -> (N, H, W*Cin), bf16 for the MXU.  No spatial padding in HBM.
    x2d = jnp.transpose(x_nchw, (0, 2, 3, 1)).reshape(N, H, W * Cin)
    x2d = x2d.astype(jnp.bfloat16)
    w_toep = _toeplitz_weights(weight_oihw, W)                 # (3, W*Cin, W*Cout)

    out2d = pl.pallas_call(
        conv_relu_kernel,
        out_shape=jax.ShapeDtypeStruct((N, H, W * Cout), out_dtype),
        grid_spec=pltpu.PrefetchScalarGridSpec(
            num_scalar_prefetch=0,
            grid=(N,),
            in_specs=[
                pl.BlockSpec((1, H, W * Cin), lambda n: (n, 0, 0)),
                pl.BlockSpec((3, W * Cin, W * Cout), lambda n: (0, 0, 0)),
            ],
            out_specs=pl.BlockSpec((1, H, W * Cout), lambda n: (n, 0, 0)),
            scratch_shapes=[pltpu.VMEM((H + 2, W * Cin), jnp.bfloat16)],
        ),
        compiler_params=pltpu.CompilerParams(
            dimension_semantics=("parallel",)),
    )(x2d, w_toep)

    # (N, H, W*Cout) -> (N, H, W, Cout) -> NCHW to match PyTorch.
    return jnp.transpose(out2d.reshape(N, H, W, Cout), (0, 3, 1, 2))


if __name__ == "__main__":
    key = jax.random.PRNGKey(0)
    k_x, k_w = jax.random.split(key)

    N, Cin, Cout, H, W = 2, 4, 8, 16, 16

    x = jax.random.normal(k_x, (N, Cin, H, W), dtype=jnp.float32)
    # Deterministic weight init (kaiming-ish scale), PyTorch OIHW layout.
    fan_in = Cin * 3 * 3
    weight = jax.random.normal(k_w, (Cout, Cin, 3, 3), dtype=jnp.float32)
    weight = weight * (2.0 / fan_in) ** 0.5

    out = conv_relu_pallas(x, weight)
    out = jax.block_until_ready(out)
    assert out.shape == (N, Cout, H, W)

    # Reference uses the same bf16 input rounding (accumulation is f32 in both),
    # so the comparison stays tight.
    x_bf = x.astype(jnp.bfloat16).astype(jnp.float32)
    w_bf = weight.astype(jnp.bfloat16).astype(jnp.float32)
    ref = jax.lax.conv_general_dilated(
        x_bf, w_bf, window_strides=(1, 1), padding="SAME",
        dimension_numbers=("NCHW", "OIHW", "NCHW"),
        precision=jax.lax.Precision.HIGHEST)
    ref = jnp.maximum(ref, 0.0)
    assert jnp.allclose(out, ref, atol=2e-3, rtol=2e-3), (
        float(jnp.max(jnp.abs(out - ref))))

    print("KERNEL_OK")
</pallas_src>

<mosaic_0001>
module attributes {stable_mosaic.version = 11 : i64} {
  func.func @conv_relu_kernel(%arg0: i32, %arg1: memref<1x16x64xbf16, #tpu.memory_space<vmem>>, %arg2: memref<3x64x128xbf16, #tpu.memory_space<vmem>>, %arg3: memref<1x16x128xf32, #tpu.memory_space<vmem>>, %arg4: memref<18x64xbf16, #tpu.memory_space<vmem>>) attributes {dimension_semantics = [#tpu.dimension_semantics<parallel>], iteration_bounds = array<i64: 2>, scalar_prefetch = 0 : i64, scratch_operands = 1 : i64, tpu.core_type = #tpu.core_type<tc>, window_params = [{transform_indices = @transform_0, window_bounds = array<i64: 1, 16, 64>}, {pipeline_mode = #tpu.pipeline_mode<synchronous>, transform_indices = @transform_1, window_bounds = array<i64: 3, 64, 128>}, {transform_indices = @transform_2, window_bounds = array<i64: 1, 16, 128>}]} {
    %cst = arith.constant 0.000000e+00 : bf16
    %0 = vector.broadcast %cst : bf16 to vector<1x64xbf16>
    %c0 = arith.constant 0 : index
    %c0_0 = arith.constant 0 : index
    %1 = vector.load %arg4[%c0, %c0_0] : memref<18x64xbf16, #tpu.memory_space<vmem>>, vector<1x64xbf16>
    tpu.vector_store %arg4[%c0, %c0_0], %0 {strides = array<i32>} : memref<18x64xbf16, #tpu.memory_space<vmem>>, vector<1x64xbf16>,
    %c17 = arith.constant 17 : index
    %c0_1 = arith.constant 0 : index
    %2 = vector.load %arg4[%c17, %c0_1] : memref<18x64xbf16, #tpu.memory_space<vmem>>, vector<1x64xbf16>
    tpu.vector_store %arg4[%c17, %c0_1], %0 {strides = array<i32>} : memref<18x64xbf16, #tpu.memory_space<vmem>>, vector<1x64xbf16>,
    %c0_2 = arith.constant 0 : index
    %c0_3 = arith.constant 0 : index
    %c0_4 = arith.constant 0 : index
    %3 = vector.load %arg1[%c0_2, %c0_3, %c0_4] : memref<1x16x64xbf16, #tpu.memory_space<vmem>>, vector<1x16x64xbf16>
    %4 = vector.shape_cast %3 : vector<1x16x64xbf16> to vector<16x64xbf16>
    %c1 = arith.constant 1 : index
    %c0_5 = arith.constant 0 : index
    %5 = vector.load %arg4[%c1, %c0_5] : memref<18x64xbf16, #tpu.memory_space<vmem>>, vector<16x64xbf16>
    tpu.vector_store %arg4[%c1, %c0_5], %4 {strides = array<i32>} : memref<18x64xbf16, #tpu.memory_space<vmem>>, vector<16x64xbf16>,
    %cst_6 = arith.constant 0.000000e+00 : f32
    %6 = vector.broadcast %cst_6 : f32 to vector<16x128xf32>
    %c0_7 = arith.constant 0 : index
    %c0_8 = arith.constant 0 : index
    %7 = vector.load %arg4[%c0_7, %c0_8] : memref<18x64xbf16, #tpu.memory_space<vmem>>, vector<16x64xbf16>
    %c0_9 = arith.constant 0 : index
    %c0_10 = arith.constant 0 : index
    %c0_11 = arith.constant 0 : index
    %8 = vector.load %arg2[%c0_9, %c0_10, %c0_11] : memref<3x64x128xbf16, #tpu.memory_space<vmem>>, vector<1x64x128xbf16>
    %9 = vector.shape_cast %8 : vector<1x64x128xbf16> to vector<64x128xbf16>
    %cst_12 = arith.constant dense<0.000000e+00> : vector<16x128xf32>
    %10 = tpu.matmul %7, %9, %cst_12 {dimension_numbers = #tpu.dot_dimension_numbers<[1], [0], [0], [1], [0, 0, 1, 1], [], []>} : vector<16x64xbf16>, vector<64x128xbf16>, vector<16x128xf32> -> vector<16x128xf32>
    %11 = arith.addf %6, %10 : vector<16x128xf32>
    %c1_13 = arith.constant 1 : index
    %c0_14 = arith.constant 0 : index
    %12 = vector.load %arg4[%c1_13, %c0_14] : memref<18x64xbf16, #tpu.memory_space<vmem>>, vector<16x64xbf16>
    %c1_15 = arith.constant 1 : index
    %c0_16 = arith.constant 0 : index
    %c0_17 = arith.constant 0 : index
    %13 = vector.load %arg2[%c1_15, %c0_16, %c0_17] : memref<3x64x128xbf16, #tpu.memory_space<vmem>>, vector<1x64x128xbf16>
    %14 = vector.shape_cast %13 : vector<1x64x128xbf16> to vector<64x128xbf16>
    %cst_18 = arith.constant dense<0.000000e+00> : vector<16x128xf32>
    %15 = tpu.matmul %12, %14, %cst_18 {dimension_numbers = #tpu.dot_dimension_numbers<[1], [0], [0], [1], [0, 0, 1, 1], [], []>} : vector<16x64xbf16>, vector<64x128xbf16>, vector<16x128xf32> -> vector<16x128xf32>
    %16 = arith.addf %11, %15 : vector<16x128xf32>
    %c2 = arith.constant 2 : index
    %c0_19 = arith.constant 0 : index
    %17 = vector.load %arg4[%c2, %c0_19] : memref<18x64xbf16, #tpu.memory_space<vmem>>, vector<16x64xbf16>
    %c2_20 = arith.constant 2 : index
    %c0_21 = arith.constant 0 : index
    %c0_22 = arith.constant 0 : index
    %18 = vector.load %arg2[%c2_20, %c0_21, %c0_22] : memref<3x64x128xbf16, #tpu.memory_space<vmem>>, vector<1x64x128xbf16>
    %19 = vector.shape_cast %18 : vector<1x64x128xbf16> to vector<64x128xbf16>
    %cst_23 = arith.constant dense<0.000000e+00> : vector<16x128xf32>
    %20 = tpu.matmul %17, %19, %cst_23 {dimension_numbers = #tpu.dot_dimension_numbers<[1], [0], [0], [1], [0, 0, 1, 1], [], []>} : vector<16x64xbf16>, vector<64x128xbf16>, vector<16x128xf32> -> vector<16x128xf32>
    %21 = arith.addf %16, %20 : vector<16x128xf32>
    %cst_24 = arith.constant 0.000000e+00 : f32
    %22 = vector.broadcast %cst_24 : f32 to vector<16x128xf32>
    %23 = arith.maximumf %21, %22 : vector<16x128xf32>
    %24 = vector.shape_cast %23 : vector<16x128xf32> to vector<1x16x128xf32>
    %c0_25 = arith.constant 0 : index
    %c0_26 = arith.constant 0 : index
    %c0_27 = arith.constant 0 : index
    %25 = vector.load %arg3[%c0_25, %c0_26, %c0_27] : memref<1x16x128xf32, #tpu.memory_space<vmem>>, vector<1x16x128xf32>
    tpu.vector_store %arg3[%c0_25, %c0_26, %c0_27], %24 {strides = array<i32>} : memref<1x16x128xf32, #tpu.memory_space<vmem>>, vector<1x16x128xf32>,
    return
  }
  func.func @transform_0(%arg0: i32) -> (i32, i32, i32) {
    %c0_i32 = arith.constant 0 : i32
    %c0_i32_0 = arith.constant 0 : i32
    %c0_i32_1 = arith.constant 0 : i32
    return %arg0, %c0_i32, %c0_i32_0 : i32, i32, i32
  }
  func.func @transform_1(%arg0: i32) -> (i32, i32, i32) {
    %c0_i32 = arith.constant 0 : i32
    %c0_i32_0 = arith.constant 0 : i32
    %c0_i32_1 = arith.constant 0 : i32
    %c0_i32_2 = arith.constant 0 : i32
    return %c0_i32, %c0_i32_0, %c0_i32_1 : i32, i32, i32
  }
  func.func @transform_2(%arg0: i32) -> (i32, i32, i32) {
    %c0_i32 = arith.constant 0 : i32
    %c0_i32_0 = arith.constant 0 : i32
    %c0_i32_1 = arith.constant 0 : i32
    return %arg0, %c0_i32, %c0_i32_0 : i32, i32, i32
  }
}

</mosaic_0001>

<llo_original>
// kernel: tpu_custom_call.1
$region0: #{tpu_custom_call.1}
  #allocation0 [shape = 'u32[]', space=smem, size = 0x4, offset = 0x4, fixed_abs, tag = 'smem constant byte address 0x4 - core index']
  #allocation1 [shape = 'u32[144,128]{1,0:T(1,128)}', space=vmem, size = 0x12000, scoped, tag = 'internal scratch']
  #allocation2 [shape = 'bf16[18,64]{1,0:T(8,128)(2,1)}', space=vmem, size = 0x1800, scoped, tag = 'scratch operand']
  %s0 = inlined_call_operand.hbm [shape: bf16[2,16,64], index: 0, kind: input, shape index: {}]
  %s1 = inlined_call_operand.hbm [shape: bf16[3,64,128], index: 1, kind: input, shape index: {}]
  %s2 = inlined_call_operand.hbm [shape: f32[2,16,128], index: 2, kind: output, shape index: {}]
  %s3 = sld [smem:[#allocation0]]
  $region49: #{tpu_custom_call.1} parent=0
    _
  %s5 = ssub.s32 1, %s3
  %s6 = scalar_select 0, %s5, %s3
  $region1: #{tpu_custom_call.1} parent=0
    #allocation3 [shape = 'u8[8192]{0}', space=vmem, size = 0x2000, scoped, tag = 'input window, operand 0']
    #allocation4 [shape = 's32[2]{0}', space=sflag, size = 0x8, scoped, tag = 'scoped memory for tpu_custom_call.1']
    #allocation5 [shape = 's32[2]{0}', space=sflag, size = 0x8, scoped, tag = 'scoped memory for tpu_custom_call.1']
    #allocation6 [shape = 'u8[49152]{0}', space=vmem, size = 0xc000, scoped, tag = 'input window, operand 1, single buffered']
    #allocation7 [shape = 's32[1]{0}', space=sflag, size = 0x4, scoped, tag = 'scoped memory for tpu_custom_call.1']
    #allocation8 [shape = 'u8[16384]{0}', space=vmem, size = 0x4000, scoped, tag = 'output window, operand 0']
    %7 = vsyncpa [#allocation4], 0
    %s8 = scalar_lea.sflag [#allocation4], 1
    %9 = vsyncpa %s8, 0
    %10 = vsyncpa [#allocation7], 0
    %11 = vsyncpa [#allocation5], 0
    %s12 = scalar_lea.sflag [#allocation5], 1
    %13 = vsyncpa %s12, 0
    loop: start=0, step=1, limit=4
    $region2: #{tpu_custom_call.1} parent=1 // loop_pre_header
      _
    $region3: #{tpu_custom_call.1} parent=1 // loop_header
      %s15 = sphi 0, %s19
      %p16 = scmp.ge.s32.totalorder %s15, 4
      %s25 = sphi 0, %s27
      %s28 = sphi 0, %s25
      %s29 = sphi 0, %s28
      %s45 = sphi 0, %s29
      %s49 = sphi 0, %s49
      %s51 = sphi 0, %s49
      %s52 = sphi 0, %s51
      %s66 = sphi 0, %s52
      %s72 = sphi 0, %s74
      %s75 = sphi 0, %s72
      %s76 = sphi 0, %s75
      %s92 = sphi 0, %s76
    $region4: #{tpu_custom_call.1} parent=1 // loop_header_branch
      %18 = sbr.rel (%p16) target = $region8
    $region5: #{tpu_custom_call.1} parent=1 // loop_body
      %s20 = ssub.s32 %s15, 1
      %s21 = ssub.s32 %s15, 2
      %s22 = sadd.s32 %s15, 1
      %s23 = ssub.s32 %s15, %s22
      %p24 = scmp.eq.s32.totalorder %s23, 0
      %s26 = sadd.s32 %s25, 1
      %s27 = scalar_select %p24, %s25, %s26
      %p30 = pneg %p24
      %p31 = scmp.eq.s32.totalorder %s15, 1
      %p32 = por %p30, %p31
      %p33 = scmp.ne.s32.totalorder %s25, %s28
      %p34 = scmp.eq.s32.totalorder %s15, 0
      %p35 = por %p33, %p34
      %p36 = scmp.ne.s32.totalorder %s25, %s28
      %p37 = scmp.eq.s32.totalorder %s20, 1
      %p38 = por %p36, %p37
      %p39 = scmp.ne.s32.totalorder %s28, %s29
      %p40 = scmp.eq.s32.totalorder %s20, 0
      %p41 = por %p39, %p40
      %p42 = scmp.ne.s32.totalorder %s28, %s29
      %p43 = scmp.eq.s32.totalorder %s21, 1
      %p44 = por %p42, %p43
      %p46 = scmp.ne.s32.totalorder %s29, %s45
      %p47 = scmp.eq.s32.totalorder %s21, 0
      %p48 = por %p46, %p47
      %s50 = sadd.s32 %s49, 1
      %p53 = scmp.eq.s32.totalorder %s15, 1
      %p54 = scmp.ne.s32.totalorder %s49, %s51
      %p55 = scmp.eq.s32.totalorder %s15, 0
      %p56 = por %p54, %p55
      %p57 = scmp.ne.s32.totalorder %s49, %s51
      %p58 = scmp.eq.s32.totalorder %s20, 1
      %p59 = por %p57, %p58
      %p60 = scmp.ne.s32.totalorder %s51, %s52
      %p61 = scmp.eq.s32.totalorder %s20, 0
      %p62 = por %p60, %p61
      %p63 = scmp.ne.s32.totalorder %s51, %s52
      %p64 = scmp.eq.s32.totalorder %s21, 1
      %p65 = por %p63, %p64
      %p67 = scmp.ne.s32.totalorder %s52, %s66
      %p68 = scmp.eq.s32.totalorder %s21, 0
      %p69 = por %p67, %p68
      %s70 = ssub.s32 %s15, %s22
      %p71 = scmp.eq.s32.totalorder %s70, 0
      %s73 = sadd.s32 %s72, 1
      %s74 = scalar_select %p71, %s72, %s73
      %p77 = pneg %p71
      %p78 = scmp.eq.s32.totalorder %s15, 1
      %p79 = por %p77, %p78
      %p80 = scmp.ne.s32.totalorder %s72, %s75
      %p81 = scmp.eq.s32.totalorder %s15, 0
      %p82 = por %p80, %p81
      %p83 = scmp.ne.s32.totalorder %s72, %s75
      %p84 = scmp.eq.s32.totalorder %s20, 1
      %p85 = por %p83, %p84
      %p86 = scmp.ne.s32.totalorder %s75, %s76
      %p87 = scmp.eq.s32.totalorder %s20, 0
      %p88 = por %p86, %p87
      %p89 = scmp.ne.s32.totalorder %s75, %s76
      %p90 = scmp.eq.s32.totalorder %s21, 1
      %p91 = por %p89, %p90
      %p93 = scmp.ne.s32.totalorder %s76, %s92
      %p94 = scmp.eq.s32.totalorder %s21, 0
      %p95 = por %p93, %p94
      %p96 = scmp.le.s32.totalorder 1, %s15
      %p97 = scmp.lt.s32.totalorder %s15, 3
      %p98 = pnand %p96, %p97
      %p99 = pneg %p98
      // Predicated region
      $region9: #{tpu_custom_call.1} parent=5 // pred_check
        _
      $region10: #{tpu_custom_call.1} parent=5 // pred_check_branch
        %101 = sbr.rel (%p98) target = $region12
      $region11: #{tpu_custom_call.1} parent=5 // pred_region
        %s102 = ssub.s32 %s15, 1
        // Predicated region
        $region13: #{tpu_custom_call.1} parent=11 // pred_check
          %p103 = pneg %p62
        $region14: #{tpu_custom_call.1} parent=11 // pred_check_branch
          %105 = sbr.rel (%p103) target = $region16
        $region15: #{tpu_custom_call.1} parent=11 // pred_region
          %s107 = ssub.s32 1536, 1536
          %108 = vsyncadd [#allocation7], %s107
          %s109 = sshll.u32 [#allocation6], 4
          %s110 = int_to_ptr.vmem [resolvable:$true] %s109
          %115 = dma.hbm_to_vmem [thread:$0]  %s1, 1536, %s110, [#allocation7], 64, 64, 4
        $region16: #{tpu_custom_call.1} parent=11 // pred_fallthru
          _
      $region12: #{tpu_custom_call.1} parent=5 // pred_fallthru
        _
      %p116 = scmp.lt.s32.totalorder %s15, 2
      // Predicated region
      $region17: #{tpu_custom_call.1} parent=5 // pred_check
        %p117 = pneg %p116
      $region18: #{tpu_custom_call.1} parent=5 // pred_check_branch
        %119 = sbr.rel (%p117) target = $region20
      $region19: #{tpu_custom_call.1} parent=5 // pred_region
        // Predicated region
        $region21: #{tpu_custom_call.1} parent=19 // pred_check
          %p120 = pneg %p35
        $region22: #{tpu_custom_call.1} parent=19 // pred_check_branch
          %122 = sbr.rel (%p120) target = $region24
        $region23: #{tpu_custom_call.1} parent=19 // pred_region
          %s123 = sand.u32 %s25, 1
          %s124 = scalar_lea.sflag [#allocation4], %s123
          %s125 = sand.u32 %s25, 1
          %s126 = smul.addr %s125, 8
          %s127 = scalar_lea.vmem [#allocation3], %s126
          %s129 = ssub.s32 128, 128
          %130 = vsyncadd %s124, %s129
          %s131 = smul.addr %s15, 2
          %s132 = smul.addr %s131, 64
          %s133 = scalar_lea.hbm %s0, %s132
          %s134 = sshll.u32 %s127, 4
          %s135 = int_to_ptr.vmem [resolvable:$true] %s134
          %140 = dma.hbm_to_vmem [thread:$0]  %s133, 128, %s135, %s124, 64, 64, 4
        $region24: #{tpu_custom_call.1} parent=19 // pred_fallthru
          _
      $region20: #{tpu_custom_call.1} parent=5 // pred_fallthru
        _
      %p141 = scmp.le.s32.totalorder 1, %s15
      %p142 = scmp.lt.s32.totalorder %s15, 3
      %p143 = pnand %p141, %p142
      %p144 = pneg %p143
      // Predicated region
      $region25: #{tpu_custom_call.1} parent=5 // pred_check
        _
      $region26: #{tpu_custom_call.1} parent=5 // pred_check_branch
        %146 = sbr.rel (%p143) target = $region28
      $region27: #{tpu_custom_call.1} parent=5 // pred_region
        %s147 = ssub.s32 %s15, 1
        %s148 = sand.u32 %s28, 1
        %s149 = scalar_lea.sflag [#allocation4], %s148
        %s150 = sand.u32 %s28, 1
        %s151 = smul.addr %s150, 8
        %s152 = scalar_lea.vmem [#allocation3], %s151
        // Predicated region
        $region29: #{tpu_custom_call.1} parent=27 // pred_check
          %p153 = pneg %p41
        $region30: #{tpu_custom_call.1} parent=27 // pred_check_branch
          %155 = sbr.rel (%p153) target = $region32
        $region31: #{tpu_custom_call.1} parent=27 // pred_region
          %156 = dma.done %s149, 128
        $region32: #{tpu_custom_call.1} parent=27 // pred_fallthru
          _
        // Predicated region
        $region33: #{tpu_custom_call.1} parent=27 // pred_check
          %p157 = pneg %p62
        $region34: #{tpu_custom_call.1} parent=27 // pred_check_branch
          %159 = sbr.rel (%p157) target = $region36
        $region35: #{tpu_custom_call.1} parent=27 // pred_region
          %160 = dma.done [#allocation7], 1536
        $region36: #{tpu_custom_call.1} parent=27 // pred_fallthru
          _
        %s161 = sand.u32 %s28, 1
        %s162 = scalar_lea.sflag [#allocation4], %s161
        %s163 = sand.u32 %s28, 1
        %s164 = smul.addr %s163, 8
        %s165 = scalar_lea.vmem [#allocation3], %s164
        %p166 = pneg %p41
        %p167 = pneg %p38
        %p168 = pneg %p62
        %p169 = pneg %p59
        %p170 = pneg %p88
        %p171 = pneg %p85
        %s172 = sand.u32 %s75, 1
        %s173 = scalar_lea.sflag [#allocation5], %s172
        %s174 = sand.u32 %s75, 1
        %s175 = smul.addr %s174, 16
        %s176 = scalar_lea.vmem [#allocation8], %s175
        %vm178 = vcmask 516096
        %vm179 = vsmask.f32 256
        %vm180 = vmand %vm178, %vm179
        %v181 = vld [vmem:[#allocation2] sm:$0x1]
        %v182 = vsel %vm180, 0, %v181
        %183 = vst [vmem:[#allocation2] sm:$0x1] %v182
        %vm184 = vsmask.f32 7938
        %vm185 = vmand %vm178, %vm184
        %v186 = vld [vmem:[#allocation2 + $0x8] sm:$0x1]
        %v187 = vsel %vm185, 0, %v186
        %188 = vst [vmem:[#allocation2 + $0x8] sm:$0x1] %v187
        %v189 = vld [vmem:[%s152] sm:$0xf]
        %v190 = vld [vmem:[%s152 + $0x4] sm:$0xf]
        %vm191 = vsmask.f32 4368
        %vm192 = vmor %vm179, %vm191
        %v194 = vshrl.u32 %v189, 16
        %v196 = vrot.slane %v194, 7
        %v197 = vshll.u32 %v189, 16
        %v199 = vor.u32 %v196, %v197
        %v200 = vrot.slane %v196, 4
        %v202 = vshrl.u32 %v190, 16
        %v204 = vrot.slane %v202, 7
        %v205 = vshll.u32 %v190, 16
        %v207 = vor.u32 %v204, %v205
        %v208 = vsel %vm192, %v200, %v207
        %v209 = vrot.slane %v204, 4
        %vm213 = vcmask 519168
        %vm214 = vmand %vm213, %vm184
        %v215 = vld [vmem:[#allocation2] sm:$0xf]
        %v216 = vsel %vm214, %v199, %v215
        %217 = vst [vmem:[#allocation2] sm:$0xf] %v216
        %vm218 = vcmask 519168
        %219 = vst.msk [vmem:[#allocation2 + $0x4] sm:$0xf] %vm218, %v208
        %v220 = vld [vmem:[#allocation2 + $0x8] sm:$0x1]
        %v221 = vsel %vm180, %v209, %v220
        %222 = vst [vmem:[#allocation2 + $0x8] sm:$0x1] %v221
        %v223 = vld [vmem:[#allocation2] sm:$0xf]
        %v224 = vld [vmem:[#allocation2 + $0x4] sm:$0xf]
        %v225 = vld [vmem:[#allocation6] sm:$0xf]
        %v226 = vld [vmem:[#allocation6 + $0x4] sm:$0xf]
        %v227 = vld [vmem:[#allocation6 + $0x8] sm:$0xf]
        %v228 = vld [vmem:[#allocation6 + $0xc] sm:$0xf]
        %v229 = vld [vmem:[#allocation6 + $0x10] sm:$0xf]
        %v230 = vld [vmem:[#allocation6 + $0x14] sm:$0xf]
        %v231 = vld [vmem:[#allocation6 + $0x18] sm:$0xf]
        %v232 = vld [vmem:[#allocation6 + $0x1c] sm:$0xf]
        %v233 = vld [vmem:[#allocation2 + $0x8] sm:$0x1]
        %s234 = scalar_lea.vmem [#allocation6], 32
        %v235 = vld [vmem:[%s234] sm:$0xf]
        %v236 = vld [vmem:[%s234 + $0x4] sm:$0xf]
        %v237 = vld [vmem:[%s234 + $0x8] sm:$0xf]
        %v238 = vld [vmem:[%s234 + $0xc] sm:$0xf]
        %v239 = vld [vmem:[%s234 + $0x10] sm:$0xf]
        %v240 = vld [vmem:[%s234 + $0x14] sm:$0xf]
        %v241 = vld [vmem:[%s234 + $0x18] sm:$0xf]
        %v242 = vld [vmem:[%s234 + $0x1c] sm:$0xf]
        %v246 = vunpack.c.l.b16 %v223
        %v247 = vunpack.c.l.b16 %v224
        %v248 = vunpack.c.l.b16 %v233
        %v249 = vpack.c.b16 %v247, %v246
        %v250 = vpack.c.b16 %v248, %v248
        %vm251 = vsmask.f32 7424
        %v253 = vshrl.u32 %v249, 16
        %v255 = vshll.u32 %v249, 16
        %v257 = vrot.slane %v255, 1
        %v258 = vor.u32 %v253, %v257
        %v260 = vshll.u32 %v250, 16
        %v262 = vrot.slane %v260, 1
        %v263 = vsel %vm251, %v258, %v262
        %v272 = vunpack.c.l.b16 %v235
        %v273 = vunpack.c.l.b16 %v236
        %v274 = vunpack.c.l.b16 %v237
        %v275 = vunpack.c.l.b16 %v238
        %v276 = vunpack.c.l.b16 %v239
        %v277 = vunpack.c.l.b16 %v240
        %v278 = vunpack.c.l.b16 %v241
        %v279 = vunpack.c.l.b16 %v242
        %v280 = vpack.c.b16 %v273, %v272
        %v281 = vpack.c.b16 %v275, %v274
        %v282 = vpack.c.b16 %v277, %v276
        %v283 = vpack.c.b16 %v279, %v278
        %vm288 = vcmask 523264
        %v290 = vsel %vm288, %v263, 0
        %292 = vmatprep.subr.bf16.mxu0 0
        %293 = vmatpush1.bf16.msra.mxu0 %v280
        %294 = vmatprep.subr.bf16.mxu0 0
        %295 = vmatpush1.bf16.msra.mxu0 %v281
        %296 = vmatprep.subr.bf16.mxu0 0
        %297 = vmatpush1.bf16.msra.mxu0 %v282
        %298 = vmatprep.subr.bf16.mxu0 0
        %299 = vmatpush1.bf16.msra.mxu0 %v283
        %300 = vmatprep.subr.bf16.mxu0 0
        %301 = vmatpush1.bf16.msra.mxu0 0
        %302 = vmatprep.subr.bf16.mxu0 0
        %303 = vmatpush1.bf16.msra.mxu0 0
        %304 = vmatprep.subr.bf16.mxu0 0
        %305 = vmatpush1.bf16.msra.mxu0 0
        %306 = vmatprep.subr.bf16.mxu0 0
        %307 = vmatpush1.bf16.msra.mxu0 0
        %308 = vmatprep.subr.bf16.mxu0 0
        %309 = vmatpush1.bf16.msra.mxu0 0
        %310 = vmatprep.subr.bf16.mxu0 0
        %311 = vmatpush1.bf16.msra.mxu0 0
        %312 = vmatprep.subr.bf16.mxu0 0
        %313 = vmatpush1.bf16.msra.mxu0 0
        %314 = vmatprep.subr.bf16.mxu0 0
        %315 = vmatpush1.bf16.msra.mxu0 0
        %316 = vmatprep.subr.bf16.mxu0 0
        %317 = vmatpush1.bf16.msra.mxu0 0
        %318 = vmatprep.subr.bf16.mxu0 0
        %319 = vmatpush1.bf16.msra.mxu0 0
        %320 = vmatprep.subr.bf16.mxu0 0
        %321 = vmatpush1.bf16.msra.mxu0 0
        %322 = vmatprep.subr.bf16.mxu0 0
        %323 = vmatpush1.bf16.msra.mxu0 0
        %324 = vmatprep.mubr.bf16.mxu0 0
        %325 = vmatmul.mubr.bf16.gmra.mrb[0].mxu0 %v290
        %v326 = vpop.f32.mrb[0].mxu0
        %v327 = vadd.f32 0.0, %v326
        %v328 = vpop.f32.mrb[0].mxu0
        %v329 = vpop.f32.mrb[0].mxu0
        %v330 = vadd.f32 0.0, %v329
        %v331 = vpop.f32.mrb[0].mxu0
        %332 = vdwg.mxu0
        %v341 = vunpack.c.l.b16 %v225
        %v342 = vunpack.c.l.b16 %v226
        %v343 = vunpack.c.l.b16 %v227
        %v344 = vunpack.c.l.b16 %v228
        %v345 = vunpack.c.l.b16 %v229
        %v346 = vunpack.c.l.b16 %v230
        %v347 = vunpack.c.l.b16 %v231
        %v348 = vunpack.c.l.b16 %v232
        %v349 = vpack.c.b16 %v342, %v341
        %v350 = vpack.c.b16 %v344, %v343
        %v351 = vpack.c.b16 %v346, %v345
        %v352 = vpack.c.b16 %v348, %v347
        %v357 = vsel %vm288, %v249, 0
        %359 = vmatprep.subr.bf16.mxu0 0
        %360 = vmatpush1.bf16.msra.mxu0 %v349
        %361 = vmatprep.subr.bf16.mxu0 0
        %362 = vmatpush1.bf16.msra.mxu0 %v350
        %363 = vmatprep.subr.bf16.mxu0 0
        %364 = vmatpush1.bf16.msra.mxu0 %v351
        %365 = vmatprep.subr.bf16.mxu0 0
        %366 = vmatpush1.bf16.msra.mxu0 %v352
        %367 = vmatprep.subr.bf16.mxu0 0
        %368 = vmatpush1.bf16.msra.mxu0 0
        %369 = vmatprep.subr.bf16.mxu0 0
        %370 = vmatpush1.bf16.msra.mxu0 0
        %371 = vmatprep.subr.bf16.mxu0 0
        %372 = vmatpush1.bf16.msra.mxu0 0
        %373 = vmatprep.subr.bf16.mxu0 0
        %374 = vmatpush1.bf16.msra.mxu0 0
        %375 = vmatprep.subr.bf16.mxu0 0
        %376 = vmatpush1.bf16.msra.mxu0 0
        %377 = vmatprep.subr.bf16.mxu0 0
        %378 = vmatpush1.bf16.msra.mxu0 0
        %379 = vmatprep.subr.bf16.mxu0 0
        %380 = vmatpush1.bf16.msra.mxu0 0
        %381 = vmatprep.subr.bf16.mxu0 0
        %382 = vmatpush1.bf16.msra.mxu0 0
        %383 = vmatprep.subr.bf16.mxu0 0
        %384 = vmatpush1.bf16.msra.mxu0 0
        %385 = vmatprep.subr.bf16.mxu0 0
        %386 = vmatpush1.bf16.msra.mxu0 0
        %387 = vmatprep.subr.bf16.mxu0 0
        %388 = vmatpush1.bf16.msra.mxu0 0
        %389 = vmatprep.subr.bf16.mxu0 0
        %390 = vmatpush1.bf16.msra.mxu0 0
        %391 = vmatprep.mubr.bf16.mxu0 0
        %392 = vmatmul.mubr.bf16.gmra.mrb[0].mxu0 %v357
        %v393 = vpop.f32.mrb[0].mxu0
        %v394 = vadd.f32 %v327, %v393
        %v395 = vpop.f32.mrb[0].mxu0
        %v396 = vpop.f32.mrb[0].mxu0
        %v397 = vadd.f32 %v330, %v396
        %v398 = vpop.f32.mrb[0].mxu0
        %399 = vdwg.mxu0
        %v400 = vld [vmem:[#allocation2] sm:$0xe]
        %s401 = scalar_lea.vmem [#allocation6], 64
        %v402 = vld [vmem:[%s401] sm:$0xf]
        %v403 = vld [vmem:[%s401 + $0x4] sm:$0xf]
        %v404 = vld [vmem:[%s401 + $0x8] sm:$0xf]
        %v405 = vld [vmem:[%s401 + $0xc] sm:$0xf]
        %v406 = vld [vmem:[%s401 + $0x10] sm:$0xf]
        %v407 = vld [vmem:[%s401 + $0x14] sm:$0xf]
        %v408 = vld [vmem:[%s401 + $0x18] sm:$0xf]
        %v409 = vld [vmem:[%s401 + $0x1c] sm:$0xf]
        %v411 = vunpack.c.l.b16 %v400
        %v412 = vpack.c.b16 %v247, %v411
        %vm413 = vcmask 1046528
        %v414 = vrot.slane %v412, 1
        %v415 = vrot.slane %v250, 1
        %v416 = vsel %vm413, %v414, %v415
        %v425 = vunpack.c.l.b16 %v402
        %v426 = vunpack.c.l.b16 %v403
        %v427 = vunpack.c.l.b16 %v404
        %v428 = vunpack.c.l.b16 %v405
        %v429 = vunpack.c.l.b16 %v406
        %v430 = vunpack.c.l.b16 %v407
        %v431 = vunpack.c.l.b16 %v408
        %v432 = vunpack.c.l.b16 %v409
        %v433 = vpack.c.b16 %v426, %v425
        %v434 = vpack.c.b16 %v428, %v427
        %v435 = vpack.c.b16 %v430, %v429
        %v436 = vpack.c.b16 %v432, %v431
        %v442 = vsel %vm288, %v416, 0
        %444 = vmatprep.subr.bf16.mxu0 0
        %445 = vmatpush1.bf16.msra.mxu0 %v433
        %446 = vmatprep.subr.bf16.mxu0 0
        %447 = vmatpush1.bf16.msra.mxu0 %v434
        %448 = vmatprep.subr.bf16.mxu0 0
        %449 = vmatpush1.bf16.msra.mxu0 %v435
        %450 = vmatprep.subr.bf16.mxu0 0
        %451 = vmatpush1.bf16.msra.mxu0 %v436
        %452 = vmatprep.subr.bf16.mxu0 0
        %453 = vmatpush1.bf16.msra.mxu0 0
        %454 = vmatprep.subr.bf16.mxu0 0
        %455 = vmatpush1.bf16.msra.mxu0 0
        %456 = vmatprep.subr.bf16.mxu0 0
        %457 = vmatpush1.bf16.msra.mxu0 0
        %458 = vmatprep.subr.bf16.mxu0 0
        %459 = vmatpush1.bf16.msra.mxu0 0
        %460 = vmatprep.subr.bf16.mxu0 0
        %461 = vmatpush1.bf16.msra.mxu0 0
        %462 = vmatprep.subr.bf16.mxu0 0
        %463 = vmatpush1.bf16.msra.mxu0 0
        %464 = vmatprep.subr.bf16.mxu0 0
        %465 = vmatpush1.bf16.msra.mxu0 0
        %466 = vmatprep.subr.bf16.mxu0 0
        %467 = vmatpush1.bf16.msra.mxu0 0
        %468 = vmatprep.subr.bf16.mxu0 0
        %469 = vmatpush1.bf16.msra.mxu0 0
        %470 = vmatprep.subr.bf16.mxu0 0
        %471 = vmatpush1.bf16.msra.mxu0 0
        %472 = vmatprep.subr.bf16.mxu0 0
        %473 = vmatpush1.bf16.msra.mxu0 0
        %474 = vmatprep.subr.bf16.mxu0 0
        %475 = vmatpush1.bf16.msra.mxu0 0
        %476 = vmatprep.mubr.bf16.mxu0 0
        %477 = vmatmul.mubr.bf16.gmra.mrb[0].mxu0 %v442
        %v478 = vpop.f32.mrb[0].mxu0
        %v479 = vadd.f32 0.0, %v478
        %v480 = vpop.f32.mrb[0].mxu0
        %v481 = vpop.f32.mrb[0].mxu0
        %v482 = vadd.f32 0.0, %v481
        %v483 = vpop.f32.mrb[0].mxu0
        %484 = vdwg.mxu0
        %v485 = vadd.f32 %v394, %v479
        %v486 = vadd.f32 %v397, %v482
        %v487 = vmax.f32 %v485, 0.0
        %v488 = vmax.f32 %v486, 0.0
        %489 = vst [vmem:[%s176] sm:$0xff] %v487
        %490 = vst [vmem:[%s176 + $0x8] sm:$0xff] %v488
        %s491 = sand.u32 %s75, 1
        %s492 = scalar_lea.sflag [#allocation5], %s491
        %s493 = sand.u32 %s75, 1
        %s494 = smul.addr %s493, 16
        %s495 = scalar_lea.vmem [#allocation8], %s494
        // Predicated region
        $region37: #{tpu_custom_call.1} parent=27 // pred_check
          %p496 = pneg %p85
        $region38: #{tpu_custom_call.1} parent=27 // pred_check_branch
          %498 = sbr.rel (%p496) target = $region40
        $region39: #{tpu_custom_call.1} parent=27 // pred_region
          %s500 = ssub.s32 256, 256
          %501 = vsyncadd %s492, %s500
          %s502 = smul.addr %s20, 2
          %s503 = smul.addr %s502, 128
          %s504 = scalar_lea.hbm %s2, %s503
          %s505 = sshll.u32 %s495, 4
          %s506 = int_to_ptr.vmem [resolvable:$true] %s505
          %511 = dma.vmem_to_hbm [thread:$0]  %s506, 256, %s504, %s492, 128, 128, 8
        $region40: #{tpu_custom_call.1} parent=27 // pred_fallthru
          _
      $region28: #{tpu_custom_call.1} parent=5 // pred_fallthru
        _
      %p512 = scmp.le.s32.totalorder 2, %s15
      // Predicated region
      $region41: #{tpu_custom_call.1} parent=5 // pred_check
        %p513 = pneg %p512
      $region42: #{tpu_custom_call.1} parent=5 // pred_check_branch
        %515 = sbr.rel (%p513) target = $region44
      $region43: #{tpu_custom_call.1} parent=5 // pred_region
        %s516 = ssub.s32 %s15, 2
        // Predicated region
        $region45: #{tpu_custom_call.1} parent=43 // pred_check
          %p517 = pneg %p91
        $region46: #{tpu_custom_call.1} parent=43 // pred_check_branch
          %519 = sbr.rel (%p517) target = $region48
        $region47: #{tpu_custom_call.1} parent=43 // pred_region
          %s520 = sand.u32 %s76, 1
          %s521 = scalar_lea.sflag [#allocation5], %s520
          %s522 = sand.u32 %s76, 1
          %s523 = smul.addr %s522, 16
          %s524 = scalar_lea.vmem [#allocation8], %s523
          %525 = dma.done %s521, 256
        $region48: #{tpu_custom_call.1} parent=43 // pred_fallthru
          _
      $region44: #{tpu_custom_call.1} parent=5 // pred_fallthru
        _
    $region6: #{tpu_custom_call.1} parent=1 // loop_footer
      %s19 = sadd.s32 1, %s15
    $region7: #{tpu_custom_call.1} parent=1 // loop_footer_branch
      %14 = sbr.rel target = $region3
    $region8: #{tpu_custom_call.1} parent=1 // loop_exit
      _
    %526 = vsyncpa [#allocation4], 1
    %s527 = scalar_lea.sflag [#allocation4], 1
    %528 = vsyncpa %s527, 1
    %529 = vsyncpa [#allocation7], 1
    %530 = vsyncpa [#allocation5], 1
    %s531 = scalar_lea.sflag [#allocation5], 1
    %532 = vsyncpa %s531, 1

</llo_original>
